<compile_context>
chip_gen: v7x
topology: tpu7x:2x2x1
jax: 0.10.0
libtpu: 0.0.40
codegen_flags: <defaults>
</compile_context>

<pallas_src>
import functools

import jax
import jax.numpy as jnp
from jax.experimental import pallas as pl
from jax.experimental.pallas import tpu as pltpu


# ----------------------------------------------------------------------------
# helpers
# ----------------------------------------------------------------------------
def _round_up(x, m):
    return ((x + m - 1) // m) * m


def _choose_seq_tile(n, target=256):
    """Pick the sequence tile and padded length.

    Short sequences (< 128) use one 8-aligned tile; otherwise pick between
    `target` (128-aligned, default 256 for v6e/v7x; use 128 on v5e) and 128,
    preferring whichever wastes less padding.
    """
    if n < 128:
        t = _round_up(max(n, 1), 8)
        return t, t
    target = max(128, (target // 128) * 128)
    best_tile, best_pad = None, None
    for cand in (target, 128):
        pad = _round_up(n, cand)
        if best_pad is None or pad < best_pad:
            best_tile, best_pad = cand, pad
    return best_tile, best_pad


# ----------------------------------------------------------------------------
# Pallas kernels
# ----------------------------------------------------------------------------
def _qkv_proj_kernel(x_ref, w_ref, b_ref, o_ref, *, num_heads, head_dim):
    """Fused QKV projection for one tm-row tile.

    x_ref:(tm,E)  w_ref:(3,E,E) [q|k|v, heads grouped]  b_ref:(3,1,E)
    o_ref:(3,H,tm,D)  -- head-major output so attention needs no transposes.

    Single K step (tk = E): one full-width MXU matmul per q/k/v, bias fused,
    f32 accumulation via preferred_element_type.  The head split is a
    VMEM-local store epilogue (overlaps the next matmul), not an HBM pass.
    """
    x = x_ref[...]                                            # (tm, E)
    for s in range(3):                                        # q, k, v
        y = jnp.dot(x, w_ref[s], preferred_element_type=jnp.float32)
        y = (y + b_ref[s].astype(jnp.float32)).astype(o_ref.dtype)  # (tm, E)
        for h in range(num_heads):
            o_ref[s, h] = y[:, h * head_dim:(h + 1) * head_dim]


def _linear_kernel(x_ref, w_ref, b_ref, o_ref):
    """One (tm, N) output tile of o = x @ w + b, single K step, no scratch."""
    y = jnp.dot(x_ref[...], w_ref[...], preferred_element_type=jnp.float32)
    o_ref[...] = (y + b_ref[...].astype(jnp.float32)).astype(o_ref.dtype)


def _flash_attention_kernel(q_ref, k_ref, v_ref, o_ref, m_ref, l_ref, acc_ref,
                            *, scale, kv_len, tkv, masked, approx_recip):
    """Flash-style online-softmax attention, head-batched.

    q_ref:(H,tq,D)  k_ref/v_ref:(H,tkv,D)  o_ref:(tq,E) in 'b n (h d)' layout.
    Scratch: m/l:(H,tq,1) f32, acc:(H,tq,D) f32, resident across the KV axis.

    Matches the reference module:
      energy = q @ k^T  (no pre-scaling);  att = softmax(energy) / sqrt(E);
      out = att @ v.
    Padded key columns (sequence padding) are masked to -inf.
    """
    ki = pl.program_id(2)

    @pl.when(ki == 0)
    def _init():
        m_ref[...] = jnp.full_like(m_ref, -jnp.inf)
        l_ref[...] = jnp.zeros_like(l_ref)
        acc_ref[...] = jnp.zeros_like(acc_ref)

    q = q_ref[...]                                            # (H, tq, D)
    k = k_ref[...]                                            # (H, tkv, D)
    v = v_ref[...]                                            # (H, tkv, D)

    # All heads' energies with ONE batched dot_general (2 matmuls per KV step).
    s = jnp.einsum("hqd,hkd->hqk", q, k,
                   preferred_element_type=jnp.float32)        # (H, tq, tkv)

    if masked:
        col = jax.lax.broadcasted_iota(jnp.int32, s.shape, 2) + ki * tkv
        s = jnp.where(col < kv_len, s, -jnp.inf)

    m_prev = m_ref[...]                                       # (H, tq, 1)
    m_new = jnp.maximum(m_prev, jnp.max(s, axis=-1, keepdims=True))
    alpha = jnp.exp(m_prev - m_new)
    p = jnp.exp(s - m_new)                                    # (H, tq, tkv)

    # Full-tensor updates: one store each for l, acc, m per KV step.
    l_ref[...] = alpha * l_ref[...] + jnp.sum(p, axis=-1, keepdims=True)
    acc_ref[...] = alpha * acc_ref[...] + jnp.einsum(
        "hqk,hkd->hqd", p.astype(v.dtype), v,
        preferred_element_type=jnp.float32)
    m_ref[...] = m_new

    @pl.when(ki == pl.num_programs(2) - 1)
    def _finish():
        # softmax normalization fused with the post-softmax / sqrt(E) scaling.
        inv = pl.reciprocal(l_ref[...] * scale, approx=approx_recip)  # (H,tq,1)
        out = (acc_ref[...] * inv).astype(o_ref.dtype)                # (H,tq,D)
        num_heads, _, head_dim = out.shape
        # Head merge to 'b n (h d)' happens once per q-tile (epilogue only);
        # the HBM-facing block write stays a lane-dense (tq, E) store.
        for h in range(num_heads):
            o_ref[:, h * head_dim:(h + 1) * head_dim] = out[h]


# ----------------------------------------------------------------------------
# Wrappers (pallas_call plumbing)
# ----------------------------------------------------------------------------
def _qkv_projection(x2d, w3, b3, *, num_heads, out_dtype, tm):
    """x2d:(Mp,E) @ w3:(3,E,E) + b3:(3,1,E) -> (3, H, Mp, D) head-major."""
    Mp, E = x2d.shape
    D = E // num_heads
    return pl.pallas_call(
        functools.partial(_qkv_proj_kernel, num_heads=num_heads, head_dim=D),
        out_shape=jax.ShapeDtypeStruct((3, num_heads, Mp, D), out_dtype),
        grid=(Mp // tm,),
        in_specs=[
            pl.BlockSpec((tm, E), lambda i: (i, 0)),
            pl.BlockSpec((3, E, E), lambda i: (0, 0, 0)),     # resident weights
            pl.BlockSpec((3, 1, E), lambda i: (0, 0, 0)),
        ],
        out_specs=pl.BlockSpec((3, num_heads, tm, D), lambda i: (0, 0, i, 0)),
        compiler_params=pltpu.CompilerParams(
            dimension_semantics=("parallel",)),
    )(x2d, w3, b3)


def _linear(x2d, w, b, *, out_dtype, tm):
    """y = x @ w + b.  x2d:(Mp,K)  w:(K,N)  b:(N,).  Single K step, resident w."""
    Mp, K = x2d.shape
    N = w.shape[1]
    return pl.pallas_call(
        _linear_kernel,
        out_shape=jax.ShapeDtypeStruct((Mp, N), out_dtype),
        grid=(Mp // tm,),
        in_specs=[
            pl.BlockSpec((tm, K), lambda i: (i, 0)),
            pl.BlockSpec((K, N), lambda i: (0, 0)),           # resident weight
            pl.BlockSpec((1, N), lambda i: (0, 0)),
        ],
        out_specs=pl.BlockSpec((tm, N), lambda i: (i, 0)),
        compiler_params=pltpu.CompilerParams(dimension_semantics=("parallel",)),
    )(x2d, w, b.reshape(1, N))


def _flash_attention(qkv5, *, kv_len, scale, out_dtype, tq, tkv, approx_recip):
    """qkv5: (3, H, B, Np, D) -> (B, Np, E) attention output in 'b n (h d)'."""
    _, H, B, Np, D = qkv5.shape
    E = H * D
    masked = (Np != kv_len)
    kernel = functools.partial(
        _flash_attention_kernel, scale=scale, kv_len=kv_len, tkv=tkv,
        masked=masked, approx_recip=approx_recip)
    return pl.pallas_call(
        kernel,
        out_shape=jax.ShapeDtypeStruct((B, Np, E), out_dtype),
        grid=(B, Np // tq, Np // tkv),         # parallel axes lead, KV innermost
        in_specs=[
            pl.BlockSpec((None, H, None, tq, D),
                         lambda b, qi, ki: (0, 0, b, qi, 0)),
            pl.BlockSpec((None, H, None, tkv, D),
                         lambda b, qi, ki: (1, 0, b, ki, 0)),
            pl.BlockSpec((None, H, None, tkv, D),
                         lambda b, qi, ki: (2, 0, b, ki, 0)),
        ],
        out_specs=pl.BlockSpec((None, tq, E), lambda b, qi, ki: (b, qi, 0)),
        scratch_shapes=[
            pltpu.VMEM((H, tq, 1), jnp.float32),   # running max  m
            pltpu.VMEM((H, tq, 1), jnp.float32),   # running sum  l
            pltpu.VMEM((H, tq, D), jnp.float32),   # output accumulator
        ],
        compiler_params=pltpu.CompilerParams(
            dimension_semantics=("parallel", "parallel", "arbitrary")),
    )(qkv5, qkv5, qkv5)


# ----------------------------------------------------------------------------
# Parameter prep + forward
# ----------------------------------------------------------------------------
def prepare_params(params, num_heads, compute_dtype=jnp.bfloat16):
    """One-time parameter prep (call once, not per forward):
      * transpose nn.Linear (out, in) weights to (in, out),
      * permute the qkv output columns so the PyTorch '(h d qkv)' interleave
        becomes contiguous [q | k | v] with heads grouped (the rearrange then
        costs nothing at runtime),
      * cast matmul operands to `compute_dtype` (bf16 = MXU fast path);
        biases and accumulation stay f32.
    """
    E = params["w_proj"].shape[0]
    H = num_heads
    D = E // H
    h = jnp.arange(H)[:, None, None]
    d = jnp.arange(D)[None, :, None]
    s = jnp.arange(3)[None, None, :]
    old_col = h * (3 * D) + d * 3 + s                          # (H, D, 3)
    perm = jnp.transpose(old_col, (2, 0, 1)).reshape(3 * E)    # order (qkv, h, d)

    w_qkv_t = params["w_qkv"].T[:, perm]                       # (E, 3E) [q|k|v]
    b_qkv_p = params["b_qkv"][perm]
    return {
        "w_qkv3": w_qkv_t.reshape(E, 3, E).transpose(1, 0, 2)
                          .astype(compute_dtype),              # (3, E, E)
        "b_qkv3": b_qkv_p.reshape(3, 1, E).astype(jnp.float32),
        "w_proj_t": params["w_proj"].T.astype(compute_dtype),  # (E, E)
        "b_proj": params["b_proj"].astype(jnp.float32),
    }


def multi_head_attention(x, prepped, num_heads, compute_dtype=jnp.bfloat16,
                         seq_tile=256):
    """Forward pass of MultiHeadAttention.  x: (B, N, E) -> (B, N, E).

    seq_tile: attention/linear row tile target; 256 for v6e/v7x, 128 for v5e.
    """
    B, N, E = x.shape
    H = num_heads
    D = E // H
    out_dtype = x.dtype
    approx = jnp.dtype(compute_dtype) != jnp.dtype(jnp.float32)

    # Pad the sequence to a tile-aligned length (padded keys are masked in the
    # attention kernel; padded query rows are sliced off at the end).
    tile, n_pad = _choose_seq_tile(N, seq_tile)
    if n_pad != N:
        x = jnp.pad(x, ((0, 0), (0, n_pad - N), (0, 0)))
    x2d = x.reshape(B * n_pad, E).astype(compute_dtype)

    # 1) fused QKV projection, emitted head-major: (3, H, B*Np, D).
    qkv = _qkv_projection(x2d, prepped["w_qkv3"], prepped["b_qkv3"],
                          num_heads=H, out_dtype=compute_dtype, tm=tile)
    qkv5 = qkv.reshape(3, H, B, n_pad, D)          # free reshape, no transpose

    # 2) flash attention (head-batched online softmax over KV tiles).
    scale = float(E) ** 0.5                        # post-softmax / sqrt(E)
    att = _flash_attention(qkv5, kv_len=N, scale=scale, out_dtype=compute_dtype,
                           tq=tile, tkv=tile, approx_recip=approx)   # (B,Np,E)

    # 3) output projection.
    out = _linear(att.reshape(B * n_pad, E), prepped["w_proj_t"],
                  prepped["b_proj"], out_dtype=out_dtype, tm=tile)
    out = out.reshape(B, n_pad, E)
    return out[:, :N, :] if n_pad != N else out


# Pure-JAX reference (same math as the PyTorch module) for a sanity check.
def _reference(x, params, num_heads):
    B, N, E = x.shape
    H = num_heads
    D = E // H
    qkv = x @ params["w_qkv"].T + params["b_qkv"]
    qkv = qkv.reshape(B, N, H, D, 3)
    q = jnp.transpose(qkv[..., 0], (0, 2, 1, 3))
    k = jnp.transpose(qkv[..., 1], (0, 2, 1, 3))
    v = jnp.transpose(qkv[..., 2], (0, 2, 1, 3))
    energy = jnp.einsum("bhqd,bhkd->bhqk", q, k)
    att = jax.nn.softmax(energy, axis=-1) / (float(E) ** 0.5)
    out = jnp.einsum("bhqk,bhkd->bhqd", att, v)
    out = jnp.transpose(out, (0, 2, 1, 3)).reshape(B, N, E)
    return out @ params["w_proj"].T + params["b_proj"]


if __name__ == "__main__":
    # Small shapes consistent with the module: emb_size=64, num_heads=8 (D=8).
    B, N, E, H = 2, 8, 64, 8
    key = jax.random.PRNGKey(0)
    kx, k1, k2, k3, k4 = jax.random.split(key, 5)

    # Deterministic synthetic parameters (nn.Linear convention: W is (out, in)).
    params = {
        "w_qkv": jax.random.normal(k1, (3 * E, E), jnp.float32) * 0.05,
        "b_qkv": jax.random.normal(k2, (3 * E,), jnp.float32) * 0.05,
        "w_proj": jax.random.normal(k3, (E, E), jnp.float32) * 0.05,
        "b_proj": jax.random.normal(k4, (E,), jnp.float32) * 0.05,
    }
    x = jax.random.normal(kx, (B, N, E), jnp.float32)

    ref = _reference(x, params, num_heads=H)

    # f32 path: tight correctness check.
    pf32 = prepare_params(params, H, compute_dtype=jnp.float32)
    out_f32 = jax.block_until_ready(
        multi_head_attention(x, pf32, H, compute_dtype=jnp.float32))
    assert out_f32.shape == (B, N, E)
    assert jnp.allclose(out_f32, ref, atol=1e-4, rtol=1e-4), "f32 mismatch"

    # bf16-matmul / f32-accumulate path (the MXU fast path on v5e/v6e/v7x).
    pbf16 = prepare_params(params, H, compute_dtype=jnp.bfloat16)
    out_bf16 = jax.block_until_ready(
        multi_head_attention(x, pbf16, H, compute_dtype=jnp.bfloat16))
    assert out_bf16.shape == (B, N, E)
    assert jnp.allclose(out_bf16.astype(jnp.float32), ref,
                        atol=3e-2, rtol=3e-2), "bf16 mismatch"

    # Non-tile-aligned sequence (exercises the padded/masked-key path, like
    # ViT's N=197): N=10 -> padded to 16 with -inf key masking.
    N2 = 10
    x2 = jax.random.normal(kx, (B, N2, E), jnp.float32)
    ref2 = _reference(x2, params, num_heads=H)
    out2 = jax.block_until_ready(
        multi_head_attention(x2, pf32, H, compute_dtype=jnp.float32))
    assert out2.shape == (B, N2, E)
    assert jnp.allclose(out2, ref2, atol=1e-4, rtol=1e-4), "masked-pad mismatch"

    print("KERNEL_OK")
</pallas_src>

<mosaic_0001>
module attributes {stable_mosaic.version = 11 : i64} {
  func.func @_qkv_proj_kernel(%arg0: i32, %arg1: memref<8x64xf32, #tpu.memory_space<vmem>>, %arg2: memref<3x64x64xf32, #tpu.memory_space<vmem>>, %arg3: memref<3x1x64xf32, #tpu.memory_space<vmem>>, %arg4: memref<3x8x8x8xf32, #tpu.memory_space<vmem>>) attributes {dimension_semantics = [#tpu.dimension_semantics<parallel>], iteration_bounds = array<i64: 2>, scalar_prefetch = 0 : i64, scratch_operands = 0 : i64, tpu.core_type = #tpu.core_type<tc>, window_params = [{transform_indices = @transform_0, window_bounds = array<i64: 8, 64>}, {pipeline_mode = #tpu.pipeline_mode<synchronous>, transform_indices = @transform_1, window_bounds = array<i64: 3, 64, 64>}, {pipeline_mode = #tpu.pipeline_mode<synchronous>, transform_indices = @transform_2, window_bounds = array<i64: 3, 1, 64>}, {transform_indices = @transform_3, window_bounds = array<i64: 3, 8, 8, 8>}]} {
    %c0 = arith.constant 0 : index
    %c0_0 = arith.constant 0 : index
    %0 = vector.load %arg1[%c0, %c0_0] : memref<8x64xf32, #tpu.memory_space<vmem>>, vector<8x64xf32>
    %c0_1 = arith.constant 0 : index
    %c0_2 = arith.constant 0 : index
    %c0_3 = arith.constant 0 : index
    %1 = vector.load %arg2[%c0_1, %c0_2, %c0_3] : memref<3x64x64xf32, #tpu.memory_space<vmem>>, vector<1x64x64xf32>
    %2 = vector.shape_cast %1 : vector<1x64x64xf32> to vector<64x64xf32>
    %cst = arith.constant dense<0.000000e+00> : vector<8x64xf32>
    %3 = tpu.matmul %0, %2, %cst {dimension_numbers = #tpu.dot_dimension_numbers<[1], [0], [0], [1], [0, 0, 1, 1], [], []>} : vector<8x64xf32>, vector<64x64xf32>, vector<8x64xf32> -> vector<8x64xf32>
    %c0_4 = arith.constant 0 : index
    %c0_5 = arith.constant 0 : index
    %c0_6 = arith.constant 0 : index
    %4 = vector.load %arg3[%c0_4, %c0_5, %c0_6] : memref<3x1x64xf32, #tpu.memory_space<vmem>>, vector<1x1x64xf32>
    %5 = vector.shape_cast %4 : vector<1x1x64xf32> to vector<1x64xf32>
    %6 = vector.broadcast %5 : vector<1x64xf32> to vector<8x64xf32>
    %7 = arith.addf %3, %6 : vector<8x64xf32>
    %8 = vector.extract_strided_slice %7 {offsets = [0, 0], sizes = [8, 8], strides = [1, 1]} : vector<8x64xf32> to vector<8x8xf32>
    %c0_7 = arith.constant 0 : index
    %c0_8 = arith.constant 0 : index
    %c0_9 = arith.constant 0 : index
    %c0_10 = arith.constant 0 : index
    %9 = vector.load %arg4[%c0_7, %c0_8, %c0_9, %c0_10] : memref<3x8x8x8xf32, #tpu.memory_space<vmem>>, vector<1x1x8x8xf32>
    %10 = vector.shape_cast %9 : vector<1x1x8x8xf32> to vector<8x8xf32>
    %11 = vector.shape_cast %8 : vector<8x8xf32> to vector<1x1x8x8xf32>
    tpu.vector_store %arg4[%c0_7, %c0_8, %c0_9, %c0_10], %11 {strides = array<i32>} : memref<3x8x8x8xf32, #tpu.memory_space<vmem>>, vector<1x1x8x8xf32>,
    %12 = vector.extract_strided_slice %7 {offsets = [0, 8], sizes = [8, 8], strides = [1, 1]} : vector<8x64xf32> to vector<8x8xf32>
    %c0_11 = arith.constant 0 : index
    %c1 = arith.constant 1 : index
    %c0_12 = arith.constant 0 : index
    %c0_13 = arith.constant 0 : index
    %13 = vector.load %arg4[%c0_11, %c1, %c0_12, %c0_13] : memref<3x8x8x8xf32, #tpu.memory_space<vmem>>, vector<1x1x8x8xf32>
    %14 = vector.shape_cast %13 : vector<1x1x8x8xf32> to vector<8x8xf32>
    %15 = vector.shape_cast %12 : vector<8x8xf32> to vector<1x1x8x8xf32>
    tpu.vector_store %arg4[%c0_11, %c1, %c0_12, %c0_13], %15 {strides = array<i32>} : memref<3x8x8x8xf32, #tpu.memory_space<vmem>>, vector<1x1x8x8xf32>,
    %16 = vector.extract_strided_slice %7 {offsets = [0, 16], sizes = [8, 8], strides = [1, 1]} : vector<8x64xf32> to vector<8x8xf32>
    %c0_14 = arith.constant 0 : index
    %c2 = arith.constant 2 : index
    %c0_15 = arith.constant 0 : index
    %c0_16 = arith.constant 0 : index
    %17 = vector.load %arg4[%c0_14, %c2, %c0_15, %c0_16] : memref<3x8x8x8xf32, #tpu.memory_space<vmem>>, vector<1x1x8x8xf32>
    %18 = vector.shape_cast %17 : vector<1x1x8x8xf32> to vector<8x8xf32>
    %19 = vector.shape_cast %16 : vector<8x8xf32> to vector<1x1x8x8xf32>
    tpu.vector_store %arg4[%c0_14, %c2, %c0_15, %c0_16], %19 {strides = array<i32>} : memref<3x8x8x8xf32, #tpu.memory_space<vmem>>, vector<1x1x8x8xf32>,
    %20 = vector.extract_strided_slice %7 {offsets = [0, 24], sizes = [8, 8], strides = [1, 1]} : vector<8x64xf32> to vector<8x8xf32>
    %c0_17 = arith.constant 0 : index
    %c3 = arith.constant 3 : index
    %c0_18 = arith.constant 0 : index
    %c0_19 = arith.constant 0 : index
    %21 = vector.load %arg4[%c0_17, %c3, %c0_18, %c0_19] : memref<3x8x8x8xf32, #tpu.memory_space<vmem>>, vector<1x1x8x8xf32>
    %22 = vector.shape_cast %21 : vector<1x1x8x8xf32> to vector<8x8xf32>
    %23 = vector.shape_cast %20 : vector<8x8xf32> to vector<1x1x8x8xf32>
    tpu.vector_store %arg4[%c0_17, %c3, %c0_18, %c0_19], %23 {strides = array<i32>} : memref<3x8x8x8xf32, #tpu.memory_space<vmem>>, vector<1x1x8x8xf32>,
    %24 = vector.extract_strided_slice %7 {offsets = [0, 32], sizes = [8, 8], strides = [1, 1]} : vector<8x64xf32> to vector<8x8xf32>
    %c0_20 = arith.constant 0 : index
    %c4 = arith.constant 4 : index
    %c0_21 = arith.constant 0 : index
    %c0_22 = arith.constant 0 : index
    %25 = vector.load %arg4[%c0_20, %c4, %c0_21, %c0_22] : memref<3x8x8x8xf32, #tpu.memory_space<vmem>>, vector<1x1x8x8xf32>
    %26 = vector.shape_cast %25 : vector<1x1x8x8xf32> to vector<8x8xf32>
    %27 = vector.shape_cast %24 : vector<8x8xf32> to vector<1x1x8x8xf32>
    tpu.vector_store %arg4[%c0_20, %c4, %c0_21, %c0_22], %27 {strides = array<i32>} : memref<3x8x8x8xf32, #tpu.memory_space<vmem>>, vector<1x1x8x8xf32>,
    %28 = vector.extract_strided_slice %7 {offsets = [0, 40], sizes = [8, 8], strides = [1, 1]} : vector<8x64xf32> to vector<8x8xf32>
    %c0_23 = arith.constant 0 : index
    %c5 = arith.constant 5 : index
    %c0_24 = arith.constant 0 : index
    %c0_25 = arith.constant 0 : index
    %29 = vector.load %arg4[%c0_23, %c5, %c0_24, %c0_25] : memref<3x8x8x8xf32, #tpu.memory_space<vmem>>, vector<1x1x8x8xf32>
    %30 = vector.shape_cast %29 : vector<1x1x8x8xf32> to vector<8x8xf32>
    %31 = vector.shape_cast %28 : vector<8x8xf32> to vector<1x1x8x8xf32>
    tpu.vector_store %arg4[%c0_23, %c5, %c0_24, %c0_25], %31 {strides = array<i32>} : memref<3x8x8x8xf32, #tpu.memory_space<vmem>>, vector<1x1x8x8xf32>,
    %32 = vector.extract_strided_slice %7 {offsets = [0, 48], sizes = [8, 8], strides = [1, 1]} : vector<8x64xf32> to vector<8x8xf32>
    %c0_26 = arith.constant 0 : index
    %c6 = arith.constant 6 : index
    %c0_27 = arith.constant 0 : index
    %c0_28 = arith.constant 0 : index
    %33 = vector.load %arg4[%c0_26, %c6, %c0_27, %c0_28] : memref<3x8x8x8xf32, #tpu.memory_space<vmem>>, vector<1x1x8x8xf32>
    %34 = vector.shape_cast %33 : vector<1x1x8x8xf32> to vector<8x8xf32>
    %35 = vector.shape_cast %32 : vector<8x8xf32> to vector<1x1x8x8xf32>
    tpu.vector_store %arg4[%c0_26, %c6, %c0_27, %c0_28], %35 {strides = array<i32>} : memref<3x8x8x8xf32, #tpu.memory_space<vmem>>, vector<1x1x8x8xf32>,
    %36 = vector.extract_strided_slice %7 {offsets = [0, 56], sizes = [8, 8], strides = [1, 1]} : vector<8x64xf32> to vector<8x8xf32>
    %c0_29 = arith.constant 0 : index
    %c7 = arith.constant 7 : index
    %c0_30 = arith.constant 0 : index
    %c0_31 = arith.constant 0 : index
    %37 = vector.load %arg4[%c0_29, %c7, %c0_30, %c0_31] : memref<3x8x8x8xf32, #tpu.memory_space<vmem>>, vector<1x1x8x8xf32>
    %38 = vector.shape_cast %37 : vector<1x1x8x8xf32> to vector<8x8xf32>
    %39 = vector.shape_cast %36 : vector<8x8xf32> to vector<1x1x8x8xf32>
    tpu.vector_store %arg4[%c0_29, %c7, %c0_30, %c0_31], %39 {strides = array<i32>} : memref<3x8x8x8xf32, #tpu.memory_space<vmem>>, vector<1x1x8x8xf32>,
    %c1_32 = arith.constant 1 : index
    %c0_33 = arith.constant 0 : index
    %c0_34 = arith.constant 0 : index
    %40 = vector.load %arg2[%c1_32, %c0_33, %c0_34] : memref<3x64x64xf32, #tpu.memory_space<vmem>>, vector<1x64x64xf32>
    %41 = vector.shape_cast %40 : vector<1x64x64xf32> to vector<64x64xf32>
    %cst_35 = arith.constant dense<0.000000e+00> : vector<8x64xf32>
    %42 = tpu.matmul %0, %41, %cst_35 {dimension_numbers = #tpu.dot_dimension_numbers<[1], [0], [0], [1], [0, 0, 1, 1], [], []>} : vector<8x64xf32>, vector<64x64xf32>, vector<8x64xf32> -> vector<8x64xf32>
    %c1_36 = arith.constant 1 : index
    %c0_37 = arith.constant 0 : index
    %c0_38 = arith.constant 0 : index
    %43 = vector.load %arg3[%c1_36, %c0_37, %c0_38] : memref<3x1x64xf32, #tpu.memory_space<vmem>>, vector<1x1x64xf32>
    %44 = vector.shape_cast %43 : vector<1x1x64xf32> to vector<1x64xf32>
    %45 = vector.broadcast %44 : vector<1x64xf32> to vector<8x64xf32>
    %46 = arith.addf %42, %45 : vector<8x64xf32>
    %47 = vector.extract_strided_slice %46 {offsets = [0, 0], sizes = [8, 8], strides = [1, 1]} : vector<8x64xf32> to vector<8x8xf32>
    %c1_39 = arith.constant 1 : index
    %c0_40 = arith.constant 0 : index
    %c0_41 = arith.constant 0 : index
    %c0_42 = arith.constant 0 : index
    %48 = vector.load %arg4[%c1_39, %c0_40, %c0_41, %c0_42] : memref<3x8x8x8xf32, #tpu.memory_space<vmem>>, vector<1x1x8x8xf32>
    %49 = vector.shape_cast %48 : vector<1x1x8x8xf32> to vector<8x8xf32>
    %50 = vector.shape_cast %47 : vector<8x8xf32> to vector<1x1x8x8xf32>
    tpu.vector_store %arg4[%c1_39, %c0_40, %c0_41, %c0_42], %50 {strides = array<i32>} : memref<3x8x8x8xf32, #tpu.memory_space<vmem>>, vector<1x1x8x8xf32>,
    %51 = vector.extract_strided_slice %46 {offsets = [0, 8], sizes = [8, 8], strides = [1, 1]} : vector<8x64xf32> to vector<8x8xf32>
    %c1_43 = arith.constant 1 : index
    %c1_44 = arith.constant 1 : index
    %c0_45 = arith.constant 0 : index
    %c0_46 = arith.constant 0 : index
    %52 = vector.load %arg4[%c1_43, %c1_44, %c0_45, %c0_46] : memref<3x8x8x8xf32, #tpu.memory_space<vmem>>, vector<1x1x8x8xf32>
    %53 = vector.shape_cast %52 : vector<1x1x8x8xf32> to vector<8x8xf32>
    %54 = vector.shape_cast %51 : vector<8x8xf32> to vector<1x1x8x8xf32>
    tpu.vector_store %arg4[%c1_43, %c1_44, %c0_45, %c0_46], %54 {strides = array<i32>} : memref<3x8x8x8xf32, #tpu.memory_space<vmem>>, vector<1x1x8x8xf32>,
    %55 = vector.extract_strided_slice %46 {offsets = [0, 16], sizes = [8, 8], strides = [1, 1]} : vector<8x64xf32> to vector<8x8xf32>
    %c1_47 = arith.constant 1 : index
    %c2_48 = arith.constant 2 : index
    %c0_49 = arith.constant 0 : index
    %c0_50 = arith.constant 0 : index
    %56 = vector.load %arg4[%c1_47, %c2_48, %c0_49, %c0_50] : memref<3x8x8x8xf32, #tpu.memory_space<vmem>>, vector<1x1x8x8xf32>
    %57 = vector.shape_cast %56 : vector<1x1x8x8xf32> to vector<8x8xf32>
    %58 = vector.shape_cast %55 : vector<8x8xf32> to vector<1x1x8x8xf32>
    tpu.vector_store %arg4[%c1_47, %c2_48, %c0_49, %c0_50], %58 {strides = array<i32>} : memref<3x8x8x8xf32, #tpu.memory_space<vmem>>, vector<1x1x8x8xf32>,
    %59 = vector.extract_strided_slice %46 {offsets = [0, 24], sizes = [8, 8], strides = [1, 1]} : vector<8x64xf32> to vector<8x8xf32>
    %c1_51 = arith.constant 1 : index
    %c3_52 = arith.constant 3 : index
    %c0_53 = arith.constant 0 : index
    %c0_54 = arith.constant 0 : index
    %60 = vector.load %arg4[%c1_51, %c3_52, %c0_53, %c0_54] : memref<3x8x8x8xf32, #tpu.memory_space<vmem>>, vector<1x1x8x8xf32>
    %61 = vector.shape_cast %60 : vector<1x1x8x8xf32> to vector<8x8xf32>
    %62 = vector.shape_cast %59 : vector<8x8xf32> to vector<1x1x8x8xf32>
    tpu.vector_store %arg4[%c1_51, %c3_52, %c0_53, %c0_54], %62 {strides = array<i32>} : memref<3x8x8x8xf32, #tpu.memory_space<vmem>>, vector<1x1x8x8xf32>,
    %63 = vector.extract_strided_slice %46 {offsets = [0, 32], sizes = [8, 8], strides = [1, 1]} : vector<8x64xf32> to vector<8x8xf32>
    %c1_55 = arith.constant 1 : index
    %c4_56 = arith.constant 4 : index
    %c0_57 = arith.constant 0 : index
    %c0_58 = arith.constant 0 : index
    %64 = vector.load %arg4[%c1_55, %c4_56, %c0_57, %c0_58] : memref<3x8x8x8xf32, #tpu.memory_space<vmem>>, vector<1x1x8x8xf32>
    %65 = vector.shape_cast %64 : vector<1x1x8x8xf32> to vector<8x8xf32>
    %66 = vector.shape_cast %63 : vector<8x8xf32> to vector<1x1x8x8xf32>
    tpu.vector_store %arg4[%c1_55, %c4_56, %c0_57, %c0_58], %66 {strides = array<i32>} : memref<3x8x8x8xf32, #tpu.memory_space<vmem>>, vector<1x1x8x8xf32>,
    %67 = vector.extract_strided_slice %46 {offsets = [0, 40], sizes = [8, 8], strides = [1, 1]} : vector<8x64xf32> to vector<8x8xf32>
    %c1_59 = arith.constant 1 : index
    %c5_60 = arith.constant 5 : index
    %c0_61 = arith.constant 0 : index
    %c0_62 = arith.constant 0 : index
    %68 = vector.load %arg4[%c1_59, %c5_60, %c0_61, %c0_62] : memref<3x8x8x8xf32, #tpu.memory_space<vmem>>, vector<1x1x8x8xf32>
    %69 = vector.shape_cast %68 : vector<1x1x8x8xf32> to vector<8x8xf32>
    %70 = vector.shape_cast %67 : vector<8x8xf32> to vector<1x1x8x8xf32>
    tpu.vector_store %arg4[%c1_59, %c5_60, %c0_61, %c0_62], %70 {strides = array<i32>} : memref<3x8x8x8xf32, #tpu.memory_space<vmem>>, vector<1x1x8x8xf32>,
    %71 = vector.extract_strided_slice %46 {offsets = [0, 48], sizes = [8, 8], strides = [1, 1]} : vector<8x64xf32> to vector<8x8xf32>
    %c1_63 = arith.constant 1 : index
    %c6_64 = arith.constant 6 : index
    %c0_65 = arith.constant 0 : index
    %c0_66 = arith.constant 0 : index
    %72 = vector.load %arg4[%c1_63, %c6_64, %c0_65, %c0_66] : memref<3x8x8x8xf32, #tpu.memory_space<vmem>>, vector<1x1x8x8xf32>
    %73 = vector.shape_cast %72 : vector<1x1x8x8xf32> to vector<8x8xf32>
    %74 = vector.shape_cast %71 : vector<8x8xf32> to vector<1x1x8x8xf32>
    tpu.vector_store %arg4[%c1_63, %c6_64, %c0_65, %c0_66], %74 {strides = array<i32>} : memref<3x8x8x8xf32, #tpu.memory_space<vmem>>, vector<1x1x8x8xf32>,
    %75 = vector.extract_strided_slice %46 {offsets = [0, 56], sizes = [8, 8], strides = [1, 1]} : vector<8x64xf32> to vector<8x8xf32>
    %c1_67 = arith.constant 1 : index
    %c7_68 = arith.constant 7 : index
    %c0_69 = arith.constant 0 : index
    %c0_70 = arith.constant 0 : index
    %76 = vector.load %arg4[%c1_67, %c7_68, %c0_69, %c0_70] : memref<3x8x8x8xf32, #tpu.memory_space<vmem>>, vector<1x1x8x8xf32>
    %77 = vector.shape_cast %76 : vector<1x1x8x8xf32> to vector<8x8xf32>
    %78 = vector.shape_cast %75 : vector<8x8xf32> to vector<1x1x8x8xf32>
    tpu.vector_store %arg4[%c1_67, %c7_68, %c0_69, %c0_70], %78 {strides = array<i32>} : memref<3x8x8x8xf32, #tpu.memory_space<vmem>>, vector<1x1x8x8xf32>,
    %c2_71 = arith.constant 2 : index
    %c0_72 = arith.constant 0 : index
    %c0_73 = arith.constant 0 : index
    %79 = vector.load %arg2[%c2_71, %c0_72, %c0_73] : memref<3x64x64xf32, #tpu.memory_space<vmem>>, vector<1x64x64xf32>
    %80 = vector.shape_cast %79 : vector<1x64x64xf32> to vector<64x64xf32>
    %cst_74 = arith.constant dense<0.000000e+00> : vector<8x64xf32>
    %81 = tpu.matmul %0, %80, %cst_74 {dimension_numbers = #tpu.dot_dimension_numbers<[1], [0], [0], [1], [0, 0, 1, 1], [], []>} : vector<8x64xf32>, vector<64x64xf32>, vector<8x64xf32> -> vector<8x64xf32>
    %c2_75 = arith.constant 2 : index
    %c0_76 = arith.constant 0 : index
    %c0_77 = arith.constant 0 : index
    %82 = vector.load %arg3[%c2_75, %c0_76, %c0_77] : memref<3x1x64xf32, #tpu.memory_space<vmem>>, vector<1x1x64xf32>
    %83 = vector.shape_cast %82 : vector<1x1x64xf32> to vector<1x64xf32>
    %84 = vector.broadcast %83 : vector<1x64xf32> to vector<8x64xf32>
    %85 = arith.addf %81, %84 : vector<8x64xf32>
    %86 = vector.extract_strided_slice %85 {offsets = [0, 0], sizes = [8, 8], strides = [1, 1]} : vector<8x64xf32> to vector<8x8xf32>
    %c2_78 = arith.constant 2 : index
    %c0_79 = arith.constant 0 : index
    %c0_80 = arith.constant 0 : index
    %c0_81 = arith.constant 0 : index
    %87 = vector.load %arg4[%c2_78, %c0_79, %c0_80, %c0_81] : memref<3x8x8x8xf32, #tpu.memory_space<vmem>>, vector<1x1x8x8xf32>
    %88 = vector.shape_cast %87 : vector<1x1x8x8xf32> to vector<8x8xf32>
    %89 = vector.shape_cast %86 : vector<8x8xf32> to vector<1x1x8x8xf32>
    tpu.vector_store %arg4[%c2_78, %c0_79, %c0_80, %c0_81], %89 {strides = array<i32>} : memref<3x8x8x8xf32, #tpu.memory_space<vmem>>, vector<1x1x8x8xf32>,
    %90 = vector.extract_strided_slice %85 {offsets = [0, 8], sizes = [8, 8], strides = [1, 1]} : vector<8x64xf32> to vector<8x8xf32>
    %c2_82 = arith.constant 2 : index
    %c1_83 = arith.constant 1 : index
    %c0_84 = arith.constant 0 : index
    %c0_85 = arith.constant 0 : index
    %91 = vector.load %arg4[%c2_82, %c1_83, %c0_84, %c0_85] : memref<3x8x8x8xf32, #tpu.memory_space<vmem>>, vector<1x1x8x8xf32>
    %92 = vector.shape_cast %91 : vector<1x1x8x8xf32> to vector<8x8xf32>
    %93 = vector.shape_cast %90 : vector<8x8xf32> to vector<1x1x8x8xf32>
    tpu.vector_store %arg4[%c2_82, %c1_83, %c0_84, %c0_85], %93 {strides = array<i32>} : memref<3x8x8x8xf32, #tpu.memory_space<vmem>>, vector<1x1x8x8xf32>,
    %94 = vector.extract_strided_slice %85 {offsets = [0, 16], sizes = [8, 8], strides = [1, 1]} : vector<8x64xf32> to vector<8x8xf32>
    %c2_86 = arith.constant 2 : index
    %c2_87 = arith.constant 2 : index
    %c0_88 = arith.constant 0 : index
    %c0_89 = arith.constant 0 : index
    %95 = vector.load %arg4[%c2_86, %c2_87, %c0_88, %c0_89] : memref<3x8x8x8xf32, #tpu.memory_space<vmem>>, vector<1x1x8x8xf32>
    %96 = vector.shape_cast %95 : vector<1x1x8x8xf32> to vector<8x8xf32>
    %97 = vector.shape_cast %94 : vector<8x8xf32> to vector<1x1x8x8xf32>
    tpu.vector_store %arg4[%c2_86, %c2_87, %c0_88, %c0_89], %97 {strides = array<i32>} : memref<3x8x8x8xf32, #tpu.memory_space<vmem>>, vector<1x1x8x8xf32>,
    %98 = vector.extract_strided_slice %85 {offsets = [0, 24], sizes = [8, 8], strides = [1, 1]} : vector<8x64xf32> to vector<8x8xf32>
    %c2_90 = arith.constant 2 : index
    %c3_91 = arith.constant 3 : index
    %c0_92 = arith.constant 0 : index
    %c0_93 = arith.constant 0 : index
    %99 = vector.load %arg4[%c2_90, %c3_91, %c0_92, %c0_93] : memref<3x8x8x8xf32, #tpu.memory_space<vmem>>, vector<1x1x8x8xf32>
    %100 = vector.shape_cast %99 : vector<1x1x8x8xf32> to vector<8x8xf32>
    %101 = vector.shape_cast %98 : vector<8x8xf32> to vector<1x1x8x8xf32>
    tpu.vector_store %arg4[%c2_90, %c3_91, %c0_92, %c0_93], %101 {strides = array<i32>} : memref<3x8x8x8xf32, #tpu.memory_space<vmem>>, vector<1x1x8x8xf32>,
    %102 = vector.extract_strided_slice %85 {offsets = [0, 32], sizes = [8, 8], strides = [1, 1]} : vector<8x64xf32> to vector<8x8xf32>
    %c2_94 = arith.constant 2 : index
    %c4_95 = arith.constant 4 : index
    %c0_96 = arith.constant 0 : index
    %c0_97 = arith.constant 0 : index
    %103 = vector.load %arg4[%c2_94, %c4_95, %c0_96, %c0_97] : memref<3x8x8x8xf32, #tpu.memory_space<vmem>>, vector<1x1x8x8xf32>
    %104 = vector.shape_cast %103 : vector<1x1x8x8xf32> to vector<8x8xf32>
    %105 = vector.shape_cast %102 : vector<8x8xf32> to vector<1x1x8x8xf32>
    tpu.vector_store %arg4[%c2_94, %c4_95, %c0_96, %c0_97], %105 {strides = array<i32>} : memref<3x8x8x8xf32, #tpu.memory_space<vmem>>, vector<1x1x8x8xf32>,
    %106 = vector.extract_strided_slice %85 {offsets = [0, 40], sizes = [8, 8], strides = [1, 1]} : vector<8x64xf32> to vector<8x8xf32>
    %c2_98 = arith.constant 2 : index
    %c5_99 = arith.constant 5 : index
    %c0_100 = arith.constant 0 : index
    %c0_101 = arith.constant 0 : index
    %107 = vector.load %arg4[%c2_98, %c5_99, %c0_100, %c0_101] : memref<3x8x8x8xf32, #tpu.memory_space<vmem>>, vector<1x1x8x8xf32>
    %108 = vector.shape_cast %107 : vector<1x1x8x8xf32> to vector<8x8xf32>
    %109 = vector.shape_cast %106 : vector<8x8xf32> to vector<1x1x8x8xf32>
    tpu.vector_store %arg4[%c2_98, %c5_99, %c0_100, %c0_101], %109 {strides = array<i32>} : memref<3x8x8x8xf32, #tpu.memory_space<vmem>>, vector<1x1x8x8xf32>,
    %110 = vector.extract_strided_slice %85 {offsets = [0, 48], sizes = [8, 8], strides = [1, 1]} : vector<8x64xf32> to vector<8x8xf32>
    %c2_102 = arith.constant 2 : index
    %c6_103 = arith.constant 6 : index
    %c0_104 = arith.constant 0 : index
    %c0_105 = arith.constant 0 : index
    %111 = vector.load %arg4[%c2_102, %c6_103, %c0_104, %c0_105] : memref<3x8x8x8xf32, #tpu.memory_space<vmem>>, vector<1x1x8x8xf32>
    %112 = vector.shape_cast %111 : vector<1x1x8x8xf32> to vector<8x8xf32>
    %113 = vector.shape_cast %110 : vector<8x8xf32> to vector<1x1x8x8xf32>
    tpu.vector_store %arg4[%c2_102, %c6_103, %c0_104, %c0_105], %113 {strides = array<i32>} : memref<3x8x8x8xf32, #tpu.memory_space<vmem>>, vector<1x1x8x8xf32>,
    %114 = vector.extract_strided_slice %85 {offsets = [0, 56], sizes = [8, 8], strides = [1, 1]} : vector<8x64xf32> to vector<8x8xf32>
    %c2_106 = arith.constant 2 : index
    %c7_107 = arith.constant 7 : index
    %c0_108 = arith.constant 0 : index
    %c0_109 = arith.constant 0 : index
    %115 = vector.load %arg4[%c2_106, %c7_107, %c0_108, %c0_109] : memref<3x8x8x8xf32, #tpu.memory_space<vmem>>, vector<1x1x8x8xf32>
    %116 = vector.shape_cast %115 : vector<1x1x8x8xf32> to vector<8x8xf32>
    %117 = vector.shape_cast %114 : vector<8x8xf32> to vector<1x1x8x8xf32>
    tpu.vector_store %arg4[%c2_106, %c7_107, %c0_108, %c0_109], %117 {strides = array<i32>} : memref<3x8x8x8xf32, #tpu.memory_space<vmem>>, vector<1x1x8x8xf32>,
    return
  }
  func.func @transform_0(%arg0: i32) -> (i32, i32) {
    %c0_i32 = arith.constant 0 : i32
    %c0_i32_0 = arith.constant 0 : i32
    return %arg0, %c0_i32 : i32, i32
  }
  func.func @transform_1(%arg0: i32) -> (i32, i32, i32) {
    %c0_i32 = arith.constant 0 : i32
    %c0_i32_0 = arith.constant 0 : i32
    %c0_i32_1 = arith.constant 0 : i32
    %c0_i32_2 = arith.constant 0 : i32
    return %c0_i32, %c0_i32_0, %c0_i32_1 : i32, i32, i32
  }
  func.func @transform_2(%arg0: i32) -> (i32, i32, i32) {
    %c0_i32 = arith.constant 0 : i32
    %c0_i32_0 = arith.constant 0 : i32
    %c0_i32_1 = arith.constant 0 : i32
    %c0_i32_2 = arith.constant 0 : i32
    return %c0_i32, %c0_i32_0, %c0_i32_1 : i32, i32, i32
  }
  func.func @transform_3(%arg0: i32) -> (i32, i32, i32, i32) {
    %c0_i32 = arith.constant 0 : i32
    %c0_i32_0 = arith.constant 0 : i32
    %c0_i32_1 = arith.constant 0 : i32
    %c0_i32_2 = arith.constant 0 : i32
    return %c0_i32, %c0_i32_0, %arg0, %c0_i32_1 : i32, i32, i32, i32
  }
}

</mosaic_0001>

<llo_original>
// kernel: tpu_custom_call.1
$region0: #{tpu_custom_call.1}
  #allocation0 [shape = 'u32[]', space=smem, size = 0x4, offset = 0x4, fixed_abs, tag = 'smem constant byte address 0x4 - core index']
  #allocation1 [shape = 'u32[144,128]{1,0:T(1,128)}', space=vmem, size = 0x12000, scoped, tag = 'internal scratch']
  %s0 = inlined_call_operand.hbm [shape: f32[16,64], index: 0, kind: input, shape index: {}]
  %s1 = inlined_call_operand.hbm [shape: f32[3,64,64], index: 1, kind: input, shape index: {}]
  %s2 = inlined_call_operand.vmem [shape: f32[3,1,64], index: 2, kind: input, shape index: {}]
  %s3 = inlined_call_operand.vmem [shape: f32[3,8,16,8], index: 3, kind: output, shape index: {}]
  %s4 = sld [smem:[#allocation0]]
  $region87: #{tpu_custom_call.1} parent=0
    _
  %s6 = ssub.s32 1, %s4
  %s7 = scalar_select 0, %s6, %s4
  $region1: #{tpu_custom_call.1} parent=0
    #allocation2 [shape = 'u8[8192]{0}', space=vmem, size = 0x2000, scoped, tag = 'input window, operand 0']
    #allocation3 [shape = 's32[2]{0}', space=sflag, size = 0x8, scoped, tag = 'scoped memory for tpu_custom_call.1']
    #allocation4 [shape = 'u8[98304]{0}', space=vmem, size = 0x18000, scoped, tag = 'input window, operand 1, single buffered']
    #allocation5 [shape = 's32[1]{0}', space=sflag, size = 0x4, scoped, tag = 'scoped memory for tpu_custom_call.1']
    #allocation6 [shape = 'u8[196608]{0}', space=vmem, size = 0x30000, scoped, tag = 'output window, operand 0']
    %8 = vsyncpa [#allocation3], 0
    %s9 = scalar_lea.sflag [#allocation3], 1
    %10 = vsyncpa %s9, 0
    %11 = vsyncpa [#allocation5], 0
    loop: start=0, step=1, limit=4
    $region2: #{tpu_custom_call.1} parent=1 // loop_pre_header
      _
    $region3: #{tpu_custom_call.1} parent=1 // loop_header
      %s13 = sphi 0, %s17
      %p14 = scmp.ge.s32.totalorder %s13, 4
      %s23 = sphi 0, %s25
      %s26 = sphi 0, %s23
      %s27 = sphi 0, %s26
      %s43 = sphi 0, %s27
      %s47 = sphi 0, %s47
      %s49 = sphi 0, %s47
      %s50 = sphi 0, %s49
      %s64 = sphi 0, %s50
      %s68 = sphi 0, %s68
      %s70 = sphi 0, %s68
      %s71 = sphi 0, %s70
      %s85 = sphi 0, %s71
      %s91 = sphi 0, %s93
      %s94 = sphi 0, %s91
      %s95 = sphi 0, %s94
      %s111 = sphi 0, %s95
    $region4: #{tpu_custom_call.1} parent=1 // loop_header_branch
      %16 = sbr.rel (%p14) target = $region8
    $region5: #{tpu_custom_call.1} parent=1 // loop_body
      %s18 = ssub.s32 %s13, 1
      %s19 = ssub.s32 %s13, 2
      %s20 = sadd.s32 %s13, 1
      %s21 = ssub.s32 %s13, %s20
      %p22 = scmp.eq.s32.totalorder %s21, 0
      %s24 = sadd.s32 %s23, 1
      %s25 = scalar_select %p22, %s23, %s24
      %p28 = pneg %p22
      %p29 = scmp.eq.s32.totalorder %s13, 1
      %p30 = por %p28, %p29
      %p31 = scmp.ne.s32.totalorder %s23, %s26
      %p32 = scmp.eq.s32.totalorder %s13, 0
      %p33 = por %p31, %p32
      %p34 = scmp.ne.s32.totalorder %s23, %s26
      %p35 = scmp.eq.s32.totalorder %s18, 1
      %p36 = por %p34, %p35
      %p37 = scmp.ne.s32.totalorder %s26, %s27
      %p38 = scmp.eq.s32.totalorder %s18, 0
      %p39 = por %p37, %p38
      %p40 = scmp.ne.s32.totalorder %s26, %s27
      %p41 = scmp.eq.s32.totalorder %s19, 1
      %p42 = por %p40, %p41
      %p44 = scmp.ne.s32.totalorder %s27, %s43
      %p45 = scmp.eq.s32.totalorder %s19, 0
      %p46 = por %p44, %p45
      %s48 = sadd.s32 %s47, 1
      %p51 = scmp.eq.s32.totalorder %s13, 1
      %p52 = scmp.ne.s32.totalorder %s47, %s49
      %p53 = scmp.eq.s32.totalorder %s13, 0
      %p54 = por %p52, %p53
      %p55 = scmp.ne.s32.totalorder %s47, %s49
      %p56 = scmp.eq.s32.totalorder %s18, 1
      %p57 = por %p55, %p56
      %p58 = scmp.ne.s32.totalorder %s49, %s50
      %p59 = scmp.eq.s32.totalorder %s18, 0
      %p60 = por %p58, %p59
      %p61 = scmp.ne.s32.totalorder %s49, %s50
      %p62 = scmp.eq.s32.totalorder %s19, 1
      %p63 = por %p61, %p62
      %p65 = scmp.ne.s32.totalorder %s50, %s64
      %p66 = scmp.eq.s32.totalorder %s19, 0
      %p67 = por %p65, %p66
      %s69 = sadd.s32 %s68, 1
      %p72 = scmp.eq.s32.totalorder %s13, 1
      %p73 = scmp.ne.s32.totalorder %s68, %s70
      %p74 = scmp.eq.s32.totalorder %s13, 0
      %p75 = por %p73, %p74
      %p76 = scmp.ne.s32.totalorder %s68, %s70
      %p77 = scmp.eq.s32.totalorder %s18, 1
      %p78 = por %p76, %p77
      %p79 = scmp.ne.s32.totalorder %s70, %s71
      %p80 = scmp.eq.s32.totalorder %s18, 0
      %p81 = por %p79, %p80
      %p82 = scmp.ne.s32.totalorder %s70, %s71
      %p83 = scmp.eq.s32.totalorder %s19, 1
      %p84 = por %p82, %p83
      %p86 = scmp.ne.s32.totalorder %s71, %s85
      %p87 = scmp.eq.s32.totalorder %s19, 0
      %p88 = por %p86, %p87
      %s89 = ssub.s32 %s13, %s20
      %p90 = scmp.eq.s32.totalorder %s89, 0
      %s92 = sadd.s32 %s91, 1
      %s93 = scalar_select %p90, %s91, %s92
      %p96 = pneg %p90
      %p97 = scmp.eq.s32.totalorder %s13, 1
      %p98 = por %p96, %p97
      %p99 = scmp.ne.s32.totalorder %s91, %s94
      %p100 = scmp.eq.s32.totalorder %s13, 0
      %p101 = por %p99, %p100
      %p102 = scmp.ne.s32.totalorder %s91, %s94
      %p103 = scmp.eq.s32.totalorder %s18, 1
      %p104 = por %p102, %p103
      %p105 = scmp.ne.s32.totalorder %s94, %s95
      %p106 = scmp.eq.s32.totalorder %s18, 0
      %p107 = por %p105, %p106
      %p108 = scmp.ne.s32.totalorder %s94, %s95
      %p109 = scmp.eq.s32.totalorder %s19, 1
      %p110 = por %p108, %p109
      %p112 = scmp.ne.s32.totalorder %s95, %s111
      %p113 = scmp.eq.s32.totalorder %s19, 0
      %p114 = por %p112, %p113
      %p115 = scmp.le.s32.totalorder 1, %s13
      %p116 = scmp.lt.s32.totalorder %s13, 3
      %p117 = pnand %p115, %p116
      %p118 = pneg %p117
      // Predicated region
      $region9: #{tpu_custom_call.1} parent=5 // pred_check
        _
      $region10: #{tpu_custom_call.1} parent=5 // pred_check_branch
        %120 = sbr.rel (%p117) target = $region12
      $region11: #{tpu_custom_call.1} parent=5 // pred_region
        %s121 = ssub.s32 %s13, 1
        // Predicated region
        $region13: #{tpu_custom_call.1} parent=11 // pred_check
          %p122 = pneg %p60
        $region14: #{tpu_custom_call.1} parent=11 // pred_check_branch
          %124 = sbr.rel (%p122) target = $region16
        $region15: #{tpu_custom_call.1} parent=11 // pred_region
          %s126 = ssub.s32 3072, 3072
          %127 = vsyncadd [#allocation5], %s126
          %s128 = sshll.u32 [#allocation4], 4
          %s129 = int_to_ptr.vmem [resolvable:$true] %s128
          %134 = dma.hbm_to_vmem [thread:$0]  %s1, 3072, %s129, [#allocation5], 128, 128, 8
        $region16: #{tpu_custom_call.1} parent=11 // pred_fallthru
          _
        // Predicated region
        $region17: #{tpu_custom_call.1} parent=11 // pred_check
          %p135 = pneg %p81
        $region18: #{tpu_custom_call.1} parent=11 // pred_check_branch
          %137 = sbr.rel (%p135) target = $region20
        $region19: #{tpu_custom_call.1} parent=11 // pred_region
          _
        $region20: #{tpu_custom_call.1} parent=11 // pred_fallthru
          _
      $region12: #{tpu_custom_call.1} parent=5 // pred_fallthru
        _
      %p138 = scmp.lt.s32.totalorder %s13, 2
      // Predicated region
      $region21: #{tpu_custom_call.1} parent=5 // pred_check
        %p139 = pneg %p138
      $region22: #{tpu_custom_call.1} parent=5 // pred_check_branch
        %141 = sbr.rel (%p139) target = $region24
      $region23: #{tpu_custom_call.1} parent=5 // pred_region
        // Predicated region
        $region25: #{tpu_custom_call.1} parent=23 // pred_check
          %p142 = pneg %p33
        $region26: #{tpu_custom_call.1} parent=23 // pred_check_branch
          %144 = sbr.rel (%p142) target = $region28
        $region27: #{tpu_custom_call.1} parent=23 // pred_region
          %s145 = sand.u32 %s23, 1
          %s146 = scalar_lea.sflag [#allocation3], %s145
          %s147 = sand.u32 %s23, 1
          %s148 = smul.addr %s147, 8
          %s149 = scalar_lea.vmem [#allocation2], %s148
          %s151 = ssub.s32 128, 128
          %152 = vsyncadd %s146, %s151
          %s153 = smul.addr %s13, 128
          %s154 = scalar_lea.hbm %s0, %s153
          %s156 = sshll.u32 %s149, 4
          %s157 = int_to_ptr.vmem [resolvable:$true] %s156
          %159 = dma.hbm_to_vmem [thread:$0]  %s154, 128, %s157, %s146
        $region28: #{tpu_custom_call.1} parent=23 // pred_fallthru
          _
      $region24: #{tpu_custom_call.1} parent=5 // pred_fallthru
        _
      %p160 = scmp.le.s32.totalorder 1, %s13
      %p161 = scmp.lt.s32.totalorder %s13, 3
      %p162 = pnand %p160, %p161
      %p163 = pneg %p162
      // Predicated region
      $region29: #{tpu_custom_call.1} parent=5 // pred_check
        _
      $region30: #{tpu_custom_call.1} parent=5 // pred_check_branch
        %165 = sbr.rel (%p162) target = $region32
      $region31: #{tpu_custom_call.1} parent=5 // pred_region
        %s166 = ssub.s32 %s13, 1
        %s167 = sand.u32 %s26, 1
        %s168 = scalar_lea.sflag [#allocation3], %s167
        %s169 = sand.u32 %s26, 1
        %s170 = smul.addr %s169, 8
        %s171 = scalar_lea.vmem [#allocation2], %s170
        // Predicated region
        $region33: #{tpu_custom_call.1} parent=31 // pred_check
          %p172 = pneg %p39
        $region34: #{tpu_custom_call.1} parent=31 // pred_check_branch
          %174 = sbr.rel (%p172) target = $region36
        $region35: #{tpu_custom_call.1} parent=31 // pred_region
          %175 = dma.done %s168, 128
        $region36: #{tpu_custom_call.1} parent=31 // pred_fallthru
          _
        // Predicated region
        $region37: #{tpu_custom_call.1} parent=31 // pred_check
          %p176 = pneg %p60
        $region38: #{tpu_custom_call.1} parent=31 // pred_check_branch
          %178 = sbr.rel (%p176) target = $region40
        $region39: #{tpu_custom_call.1} parent=31 // pred_region
          %179 = dma.done [#allocation5], 3072
        $region40: #{tpu_custom_call.1} parent=31 // pred_fallthru
          _
        %s180 = sand.u32 %s26, 1
        %s181 = scalar_lea.sflag [#allocation3], %s180
        %s182 = sand.u32 %s26, 1
        %s183 = smul.addr %s182, 8
        %s184 = scalar_lea.vmem [#allocation2], %s183
        %p185 = pneg %p39
        %p186 = pneg %p36
        %p187 = pneg %p60
        %p188 = pneg %p57
        %p189 = pneg %p81
        %p190 = pneg %p78
        %p191 = pneg %p107
        %p192 = pneg %p104
        %s193 = sand.u32 %s94, 1
        %s194 = sand.u32 %s94, 1
        %s195 = smul.addr %s194, 192
        %s196 = scalar_lea.vmem [#allocation6], %s195
        %v197 = vld [vmem:[%s171] sm:$0xff]
        %v198 = vld [vmem:[#allocation4] sm:$0xff]
        %v199 = vld [vmem:[#allocation4 + $0x8] sm:$0xff]
        %v200 = vld [vmem:[#allocation4 + $0x10] sm:$0xff]
        %v201 = vld [vmem:[#allocation4 + $0x18] sm:$0xff]
        %v202 = vld [vmem:[#allocation4 + $0x20] sm:$0xff]
        %v203 = vld [vmem:[#allocation4 + $0x28] sm:$0xff]
        %v204 = vld [vmem:[#allocation4 + $0x30] sm:$0xff]
        %v205 = vld [vmem:[#allocation4 + $0x38] sm:$0xff]
        %v206 = vld [vmem:[%s2] sm:$0x1]
        %v208 = vlaneseq
        %v209 = vshrl.u32 %v208, 7
        %v210 = vsub.s32 0, %v209
        %v211 = vrot.slane %v206, %v210
        %vm213 = vcmask 523264
        %v215 = vsel %vm213, %v197, 0
        %217 = vmatprep.subr.mxu0 0.0
        %218 = vmatpush1.msra.mxu0 %v198
        %219 = vmatprep.subr.mxu0 0.0
        %220 = vmatpush1.msra.mxu0 %v199
        %221 = vmatprep.subr.mxu0 0.0
        %222 = vmatpush1.msra.mxu0 %v200
        %223 = vmatprep.subr.mxu0 0.0
        %224 = vmatpush1.msra.mxu0 %v201
        %225 = vmatprep.subr.mxu0 0.0
        %226 = vmatpush1.msra.mxu0 %v202
        %227 = vmatprep.subr.mxu0 0.0
        %228 = vmatpush1.msra.mxu0 %v203
        %229 = vmatprep.subr.mxu0 0.0
        %230 = vmatpush1.msra.mxu0 %v204
        %231 = vmatprep.subr.mxu0 0.0
        %232 = vmatpush1.msra.mxu0 %v205
        %233 = vmatprep.subr.mxu0 0.0
        %234 = vmatpush1.msra.mxu0 0.0
        %235 = vmatprep.subr.mxu0 0.0
        %236 = vmatpush1.msra.mxu0 0.0
        %237 = vmatprep.subr.mxu0 0.0
        %238 = vmatpush1.msra.mxu0 0.0
        %239 = vmatprep.subr.mxu0 0.0
        %240 = vmatpush1.msra.mxu0 0.0
        %241 = vmatprep.subr.mxu0 0.0
        %242 = vmatpush1.msra.mxu0 0.0
        %243 = vmatprep.subr.mxu0 0.0
        %244 = vmatpush1.msra.mxu0 0.0
        %245 = vmatprep.subr.mxu0 0.0
        %246 = vmatpush1.msra.mxu0 0.0
        %247 = vmatprep.subr.mxu0 0.0
        %248 = vmatpush1.msra.mxu0 0.0
        %249 = vmatprep.subr.mxu0 0.0
        %250 = vmatpush1.msra.mxu0 0.0
        %251 = vmatprep.subr.mxu0 0.0
        %252 = vmatpush1.msra.mxu0 0.0
        %253 = vmatprep.subr.mxu0 0.0
        %254 = vmatpush1.msra.mxu0 0.0
        %255 = vmatprep.subr.mxu0 0.0
        %256 = vmatpush1.msra.mxu0 0.0
        %257 = vmatprep.subr.mxu0 0.0
        %258 = vmatpush1.msra.mxu0 0.0
        %259 = vmatprep.subr.mxu0 0.0
        %260 = vmatpush1.msra.mxu0 0.0
        %261 = vmatprep.subr.mxu0 0.0
        %262 = vmatpush1.msra.mxu0 0.0
        %263 = vmatprep.subr.mxu0 0.0
        %264 = vmatpush1.msra.mxu0 0.0
        %265 = vmatprep.subr.mxu0 0.0
        %266 = vmatpush1.msra.mxu0 0.0
        %267 = vmatprep.subr.mxu0 0.0
        %268 = vmatpush1.msra.mxu0 0.0
        %269 = vmatprep.subr.mxu0 0.0
        %270 = vmatpush1.msra.mxu0 0.0
        %271 = vmatprep.subr.mxu0 0.0
        %272 = vmatpush1.msra.mxu0 0.0
        %273 = vmatprep.subr.mxu0 0.0
        %274 = vmatpush1.msra.mxu0 0.0
        %275 = vmatprep.subr.mxu0 0.0
        %276 = vmatpush1.msra.mxu0 0.0
        %277 = vmatprep.subr.mxu0 0.0
        %278 = vmatpush1.msra.mxu0 0.0
        %279 = vmatprep.subr.mxu0 0.0
        %280 = vmatpush1.msra.mxu0 0.0
        %281 = vmatprep.mubr.f32.mxu0 0.0
        %282 = vmatmul.mubr.f32.gmra.mrb[0].mxu0 %v215
        %v283 = vpop.f32.mrb[0].mxu0
        %v284 = vadd.f32 %v211, %v283
        %v285 = vpop.f32.mrb[0].mxu0
        %286 = vdwg.mxu0
        %vm287 = vcmask 64512
        %288 = vst.msk [vmem:[%s196] sm:$0xff] %vm287, %v284
        %290 = vrot.lane.b32.xlu0 %v284, 120
        %v291 = vpop.permute.xlu0 %290
        %s293 = scalar_lea.vmem %s196, 8 [#allocation6]
        %294 = vst.msk [vmem:[%s293] sm:$0xff] %vm287, %v291
        %295 = vrot.lane.b32.xlu0 %v284, 112
        %v296 = vpop.permute.xlu0 %295
        %s298 = scalar_lea.vmem %s196, 16 [#allocation6]
        %299 = vst.msk [vmem:[%s298] sm:$0xff] %vm287, %v296
        %300 = vrot.lane.b32.xlu0 %v284, 104
        %v301 = vpop.permute.xlu0 %300
        %s303 = scalar_lea.vmem %s196, 24 [#allocation6]
        %304 = vst.msk [vmem:[%s303] sm:$0xff] %vm287, %v301
        %305 = vrot.lane.b32.xlu0 %v284, 96
        %v306 = vpop.permute.xlu0 %305
        %s308 = scalar_lea.vmem %s196, 32 [#allocation6]
        %309 = vst.msk [vmem:[%s308] sm:$0xff] %vm287, %v306
        %310 = vrot.lane.b32.xlu0 %v284, 88
        %v311 = vpop.permute.xlu0 %310
        %s313 = scalar_lea.vmem %s196, 40 [#allocation6]
        %314 = vst.msk [vmem:[%s313] sm:$0xff] %vm287, %v311
        %315 = vrot.lane.b32.xlu0 %v284, 80
        %v316 = vpop.permute.xlu0 %315
        %s318 = scalar_lea.vmem %s196, 48 [#allocation6]
        %319 = vst.msk [vmem:[%s318] sm:$0xff] %vm287, %v316
        %320 = vrot.lane.b32.xlu0 %v284, 72
        %v321 = vpop.permute.xlu0 %320
        %s323 = scalar_lea.vmem %s196, 56 [#allocation6]
        %324 = vst.msk [vmem:[%s323] sm:$0xff] %vm287, %v321
        %s325 = scalar_lea.vmem [#allocation4], 64
        %v326 = vld [vmem:[%s325] sm:$0xff]
        %v327 = vld [vmem:[%s325 + $0x8] sm:$0xff]
        %v328 = vld [vmem:[%s325 + $0x10] sm:$0xff]
        %v329 = vld [vmem:[%s325 + $0x18] sm:$0xff]
        %v330 = vld [vmem:[%s325 + $0x20] sm:$0xff]
        %v331 = vld [vmem:[%s325 + $0x28] sm:$0xff]
        %v332 = vld [vmem:[%s325 + $0x30] sm:$0xff]
        %v333 = vld [vmem:[%s325 + $0x38] sm:$0xff]
        %s334 = scalar_lea.vmem %s2, 1
        %v335 = vld [vmem:[%s334] sm:$0x1]
        %v337 = vlaneseq
        %v338 = vshrl.u32 %v337, 7
        %v339 = vsub.s32 0, %v338
        %v340 = vrot.slane %v335, %v339
        %342 = vmatprep.subr.mxu0 0.0
        %343 = vmatpush1.msra.mxu0 %v326
        %344 = vmatprep.subr.mxu0 0.0
        %345 = vmatpush1.msra.mxu0 %v327
        %346 = vmatprep.subr.mxu0 0.0
        %347 = vmatpush1.msra.mxu0 %v328
        %348 = vmatprep.subr.mxu0 0.0
        %349 = vmatpush1.msra.mxu0 %v329
        %350 = vmatprep.subr.mxu0 0.0
        %351 = vmatpush1.msra.mxu0 %v330
        %352 = vmatprep.subr.mxu0 0.0
        %353 = vmatpush1.msra.mxu0 %v331
        %354 = vmatprep.subr.mxu0 0.0
        %355 = vmatpush1.msra.mxu0 %v332
        %356 = vmatprep.subr.mxu0 0.0
        %357 = vmatpush1.msra.mxu0 %v333
        %358 = vmatprep.subr.mxu0 0.0
        %359 = vmatpush1.msra.mxu0 0.0
        %360 = vmatprep.subr.mxu0 0.0
        %361 = vmatpush1.msra.mxu0 0.0
        %362 = vmatprep.subr.mxu0 0.0
        %363 = vmatpush1.msra.mxu0 0.0
        %364 = vmatprep.subr.mxu0 0.0
        %365 = vmatpush1.msra.mxu0 0.0
        %366 = vmatprep.subr.mxu0 0.0
        %367 = vmatpush1.msra.mxu0 0.0
        %368 = vmatprep.subr.mxu0 0.0
        %369 = vmatpush1.msra.mxu0 0.0
        %370 = vmatprep.subr.mxu0 0.0
        %371 = vmatpush1.msra.mxu0 0.0
        %372 = vmatprep.subr.mxu0 0.0
        %373 = vmatpush1.msra.mxu0 0.0
        %374 = vmatprep.subr.mxu0 0.0
        %375 = vmatpush1.msra.mxu0 0.0
        %376 = vmatprep.subr.mxu0 0.0
        %377 = vmatpush1.msra.mxu0 0.0
        %378 = vmatprep.subr.mxu0 0.0
        %379 = vmatpush1.msra.mxu0 0.0
        %380 = vmatprep.subr.mxu0 0.0
        %381 = vmatpush1.msra.mxu0 0.0
        %382 = vmatprep.subr.mxu0 0.0
        %383 = vmatpush1.msra.mxu0 0.0
        %384 = vmatprep.subr.mxu0 0.0
        %385 = vmatpush1.msra.mxu0 0.0
        %386 = vmatprep.subr.mxu0 0.0
        %387 = vmatpush1.msra.mxu0 0.0
        %388 = vmatprep.subr.mxu0 0.0
        %389 = vmatpush1.msra.mxu0 0.0
        %390 = vmatprep.subr.mxu0 0.0
        %391 = vmatpush1.msra.mxu0 0.0
        %392 = vmatprep.subr.mxu0 0.0
        %393 = vmatpush1.msra.mxu0 0.0
        %394 = vmatprep.subr.mxu0 0.0
        %395 = vmatpush1.msra.mxu0 0.0
        %396 = vmatprep.subr.mxu0 0.0
        %397 = vmatpush1.msra.mxu0 0.0
        %398 = vmatprep.subr.mxu0 0.0
        %399 = vmatpush1.msra.mxu0 0.0
        %400 = vmatprep.subr.mxu0 0.0
        %401 = vmatpush1.msra.mxu0 0.0
        %402 = vmatprep.subr.mxu0 0.0
        %403 = vmatpush1.msra.mxu0 0.0
        %404 = vmatprep.subr.mxu0 0.0
        %405 = vmatpush1.msra.mxu0 0.0
        %406 = vmatprep.mubr.f32.mxu0 0.0
        %407 = vmatmul.mubr.f32.gmra.mrb[0].mxu0 %v215
        %v408 = vpop.f32.mrb[0].mxu0
        %v409 = vadd.f32 %v340, %v408
        %v410 = vpop.f32.mrb[0].mxu0
        %411 = vdwg.mxu0
        %s412 = scalar_lea.vmem %s196, 64 [#allocation6]
        %413 = vst.msk [vmem:[%s412] sm:$0xff] %vm287, %v409
        %415 = vrot.lane.b32.xlu0 %v409, 120
        %v416 = vpop.permute.xlu0 %415
        %s418 = scalar_lea.vmem %s196, 72 [#allocation6]
        %419 = vst.msk [vmem:[%s418] sm:$0xff] %vm287, %v416
        %420 = vrot.lane.b32.xlu0 %v409, 112
        %v421 = vpop.permute.xlu0 %420
        %s423 = scalar_lea.vmem %s196, 80 [#allocation6]
        %424 = vst.msk [vmem:[%s423] sm:$0xff] %vm287, %v421
        %425 = vrot.lane.b32.xlu0 %v409, 104
        %v426 = vpop.permute.xlu0 %425
        %s428 = scalar_lea.vmem %s196, 88 [#allocation6]
        %429 = vst.msk [vmem:[%s428] sm:$0xff] %vm287, %v426
        %430 = vrot.lane.b32.xlu0 %v409, 96
        %v431 = vpop.permute.xlu0 %430
        %s433 = scalar_lea.vmem %s196, 96 [#allocation6]
        %434 = vst.msk [vmem:[%s433] sm:$0xff] %vm287, %v431
        %435 = vrot.lane.b32.xlu0 %v409, 88
        %v436 = vpop.permute.xlu0 %435
        %s438 = scalar_lea.vmem %s196, 104 [#allocation6]
        %439 = vst.msk [vmem:[%s438] sm:$0xff] %vm287, %v436
        %440 = vrot.lane.b32.xlu0 %v409, 80
        %v441 = vpop.permute.xlu0 %440
        %s443 = scalar_lea.vmem %s196, 112 [#allocation6]
        %444 = vst.msk [vmem:[%s443] sm:$0xff] %vm287, %v441
        %445 = vrot.lane.b32.xlu0 %v409, 72
        %v446 = vpop.permute.xlu0 %445
        %s448 = scalar_lea.vmem %s196, 120 [#allocation6]
        %449 = vst.msk [vmem:[%s448] sm:$0xff] %vm287, %v446
        %s450 = scalar_lea.vmem [#allocation4], 128
        %v451 = vld [vmem:[%s450] sm:$0xff]
        %v452 = vld [vmem:[%s450 + $0x8] sm:$0xff]
        %v453 = vld [vmem:[%s450 + $0x10] sm:$0xff]
        %v454 = vld [vmem:[%s450 + $0x18] sm:$0xff]
        %v455 = vld [vmem:[%s450 + $0x20] sm:$0xff]
        %v456 = vld [vmem:[%s450 + $0x28] sm:$0xff]
        %v457 = vld [vmem:[%s450 + $0x30] sm:$0xff]
        %v458 = vld [vmem:[%s450 + $0x38] sm:$0xff]
        %s459 = scalar_lea.vmem %s2, 2
        %v460 = vld [vmem:[%s459] sm:$0x1]
        %v462 = vlaneseq
        %v463 = vshrl.u32 %v462, 7
        %v464 = vsub.s32 0, %v463
        %v465 = vrot.slane %v460, %v464
        %467 = vmatprep.subr.mxu0 0.0
        %468 = vmatpush1.msra.mxu0 %v451
        %469 = vmatprep.subr.mxu0 0.0
        %470 = vmatpush1.msra.mxu0 %v452
        %471 = vmatprep.subr.mxu0 0.0
        %472 = vmatpush1.msra.mxu0 %v453
        %473 = vmatprep.subr.mxu0 0.0
        %474 = vmatpush1.msra.mxu0 %v454
        %475 = vmatprep.subr.mxu0 0.0
        %476 = vmatpush1.msra.mxu0 %v455
        %477 = vmatprep.subr.mxu0 0.0
        %478 = vmatpush1.msra.mxu0 %v456
        %479 = vmatprep.subr.mxu0 0.0
        %480 = vmatpush1.msra.mxu0 %v457
        %481 = vmatprep.subr.mxu0 0.0
        %482 = vmatpush1.msra.mxu0 %v458
        %483 = vmatprep.subr.mxu0 0.0
        %484 = vmatpush1.msra.mxu0 0.0
        %485 = vmatprep.subr.mxu0 0.0
        %486 = vmatpush1.msra.mxu0 0.0
        %487 = vmatprep.subr.mxu0 0.0
        %488 = vmatpush1.msra.mxu0 0.0
        %489 = vmatprep.subr.mxu0 0.0
        %490 = vmatpush1.msra.mxu0 0.0
        %491 = vmatprep.subr.mxu0 0.0
        %492 = vmatpush1.msra.mxu0 0.0
        %493 = vmatprep.subr.mxu0 0.0
        %494 = vmatpush1.msra.mxu0 0.0
        %495 = vmatprep.subr.mxu0 0.0
        %496 = vmatpush1.msra.mxu0 0.0
        %497 = vmatprep.subr.mxu0 0.0
        %498 = vmatpush1.msra.mxu0 0.0
        %499 = vmatprep.subr.mxu0 0.0
        %500 = vmatpush1.msra.mxu0 0.0
        %501 = vmatprep.subr.mxu0 0.0
        %502 = vmatpush1.msra.mxu0 0.0
        %503 = vmatprep.subr.mxu0 0.0
        %504 = vmatpush1.msra.mxu0 0.0
        %505 = vmatprep.subr.mxu0 0.0
        %506 = vmatpush1.msra.mxu0 0.0
        %507 = vmatprep.subr.mxu0 0.0
        %508 = vmatpush1.msra.mxu0 0.0
        %509 = vmatprep.subr.mxu0 0.0
        %510 = vmatpush1.msra.mxu0 0.0
        %511 = vmatprep.subr.mxu0 0.0
        %512 = vmatpush1.msra.mxu0 0.0
        %513 = vmatprep.subr.mxu0 0.0
        %514 = vmatpush1.msra.mxu0 0.0
        %515 = vmatprep.subr.mxu0 0.0
        %516 = vmatpush1.msra.mxu0 0.0
        %517 = vmatprep.subr.mxu0 0.0
        %518 = vmatpush1.msra.mxu0 0.0
        %519 = vmatprep.subr.mxu0 0.0
        %520 = vmatpush1.msra.mxu0 0.0
        %521 = vmatprep.subr.mxu0 0.0
        %522 = vmatpush1.msra.mxu0 0.0
        %523 = vmatprep.subr.mxu0 0.0
        %524 = vmatpush1.msra.mxu0 0.0
        %525 = vmatprep.subr.mxu0 0.0
        %526 = vmatpush1.msra.mxu0 0.0
        %527 = vmatprep.subr.mxu0 0.0
        %528 = vmatpush1.msra.mxu0 0.0
        %529 = vmatprep.subr.mxu0 0.0
        %530 = vmatpush1.msra.mxu0 0.0
        %531 = vmatprep.mubr.f32.mxu0 0.0
        %532 = vmatmul.mubr.f32.gmra.mrb[0].mxu0 %v215
        %v533 = vpop.f32.mrb[0].mxu0
        %v534 = vadd.f32 %v465, %v533
        %v535 = vpop.f32.mrb[0].mxu0
        %536 = vdwg.mxu0
        %s537 = scalar_lea.vmem %s196, 128 [#allocation6]
        %538 = vst.msk [vmem:[%s537] sm:$0xff] %vm287, %v534
        %540 = vrot.lane.b32.xlu0 %v534, 120
        %v541 = vpop.permute.xlu0 %540
        %s543 = scalar_lea.vmem %s196, 136 [#allocation6]
        %544 = vst.msk [vmem:[%s543] sm:$0xff] %vm287, %v541
        %545 = vrot.lane.b32.xlu0 %v534, 112
        %v546 = vpop.permute.xlu0 %545
        %s548 = scalar_lea.vmem %s196, 144 [#allocation6]
        %549 = vst.msk [vmem:[%s548] sm:$0xff] %vm287, %v546
        %550 = vrot.lane.b32.xlu0 %v534, 104
        %v551 = vpop.permute.xlu0 %550
        %s553 = scalar_lea.vmem %s196, 152 [#allocation6]
        %554 = vst.msk [vmem:[%s553] sm:$0xff] %vm287, %v551
        %555 = vrot.lane.b32.xlu0 %v534, 96
        %v556 = vpop.permute.xlu0 %555
        %s558 = scalar_lea.vmem %s196, 160 [#allocation6]
        %559 = vst.msk [vmem:[%s558] sm:$0xff] %vm287, %v556
        %560 = vrot.lane.b32.xlu0 %v534, 88
        %v561 = vpop.permute.xlu0 %560
        %s563 = scalar_lea.vmem %s196, 168 [#allocation6]
        %564 = vst.msk [vmem:[%s563] sm:$0xff] %vm287, %v561
        %565 = vrot.lane.b32.xlu0 %v534, 80
        %v566 = vpop.permute.xlu0 %565
        %s568 = scalar_lea.vmem %s196, 176 [#allocation6]
        %569 = vst.msk [vmem:[%s568] sm:$0xff] %vm287, %v566
        %570 = vrot.lane.b32.xlu0 %v534, 72
        %v571 = vpop.permute.xlu0 %570
        %s573 = scalar_lea.vmem %s196, 184 [#allocation6]
        %574 = vst.msk [vmem:[%s573] sm:$0xff] %vm287, %v571
        %s575 = sand.u32 %s94, 1
        %s576 = sand.u32 %s94, 1
        %s577 = smul.addr %s576, 192
        %s578 = scalar_lea.vmem [#allocation6], %s577
        // Predicated region
        $region41: #{tpu_custom_call.1} parent=31 // pred_check
          %p579 = pneg %p104
        $region42: #{tpu_custom_call.1} parent=31 // pred_check_branch
          %581 = sbr.rel (%p579) target = $region44
        $region43: #{tpu_custom_call.1} parent=31 // pred_region
          %s582 = smul.addr %s18, 8
          %s583 = scalar_lea.vmem %s3, %s582
          // Predicated region
          $region45: #{tpu_custom_call.1} parent=43 // pred_check
            _
          $region46: #{tpu_custom_call.1} parent=43 // pred_check_branch
            %585 = sbr.rel (0) target = $region48
          $region47: #{tpu_custom_call.1} parent=43 // pred_region
            // Predicated region
            $region49: #{tpu_custom_call.1} parent=47 // pred_check
              _
            $region50: #{tpu_custom_call.1} parent=47 // pred_check_branch
              %587 = sbr.rel (0) target = $region52
            $region51: #{tpu_custom_call.1} parent=47 // pred_region
              // Predicated region
              $region64: #{tpu_custom_call.1} parent=51 // pred_check
                _
              $region65: #{tpu_custom_call.1} parent=51 // pred_check_branch
                %648 = sbr.rel (0) target = $region67
              $region66: #{tpu_custom_call.1} parent=51 // pred_region
                loop: start=0, step=1, limit=1
                $region68: #{tpu_custom_call.1} parent=66 // loop_pre_header
                  _
                $region69: #{tpu_custom_call.1} parent=66 // loop_header
                  %s650 = sphi 0, %s654
                  %p651 = scmp.ge.s32.totalorder %s650, 1
                  %s655 = sphi %s578, %s578
                  %s656 = sphi %s583, %s583
                $region70: #{tpu_custom_call.1} parent=66 // loop_header_branch
                  %653 = sbr.rel (%p651) target = $region74
                $region71: #{tpu_custom_call.1} parent=66 // loop_body
                  %v657 = vld [vmem:[%s655] sm:$0xff]
                  %658 = vst [vmem:[%s656] sm:$0xff] %v657
                  %v659 = vld [vmem:[%s655 + $0x8] sm:$0xff]
                  %660 = vst [vmem:[%s656 + $0x10] sm:$0xff] %v659
                  %v661 = vld [vmem:[%s655 + $0x10] sm:$0xff]
                  %662 = vst [vmem:[%s656 + $0x20] sm:$0xff] %v661
                  %v663 = vld [vmem:[%s655 + $0x18] sm:$0xff]
                  %664 = vst [vmem:[%s656 + $0x30] sm:$0xff] %v663
                  %v665 = vld [vmem:[%s655 + $0x20] sm:$0xff]
                  %666 = vst [vmem:[%s656 + $0x40] sm:$0xff] %v665
                  %v667 = vld [vmem:[%s655 + $0x28] sm:$0xff]
                  %668 = vst [vmem:[%s656 + $0x50] sm:$0xff] %v667
                  %v669 = vld [vmem:[%s655 + $0x30] sm:$0xff]
                  %670 = vst [vmem:[%s656 + $0x60] sm:$0xff] %v669
                  %v671 = vld [vmem:[%s655 + $0x38] sm:$0xff]
                  %672 = vst [vmem:[%s656 + $0x70] sm:$0xff] %v671
                  %v673 = vld [vmem:[%s655 + $0x40] sm:$0xff]
                  %674 = vst [vmem:[%s656 + $0x80] sm:$0xff] %v673
                  %v675 = vld [vmem:[%s655 + $0x48] sm:$0xff]
                  %676 = vst [vmem:[%s656 + $0x90] sm:$0xff] %v675
                  %v677 = vld [vmem:[%s655 + $0x50] sm:$0xff]
                  %678 = vst [vmem:[%s656 + $0xa0] sm:$0xff] %v677
                  %v679 = vld [vmem:[%s655 + $0x58] sm:$0xff]
                  %680 = vst [vmem:[%s656 + $0xb0] sm:$0xff] %v679
                  %v681 = vld [vmem:[%s655 + $0x60] sm:$0xff]
                  %682 = vst [vmem:[%s656 + $0xc0] sm:$0xff] %v681
                  %v683 = vld [vmem:[%s655 + $0x68] sm:$0xff]
                  %684 = vst [vmem:[%s656 + $0xd0] sm:$0xff] %v683
                  %v685 = vld [vmem:[%s655 + $0x70] sm:$0xff]
                  %686 = vst [vmem:[%s656 + $0xe0] sm:$0xff] %v685
                  %v687 = vld [vmem:[%s655 + $0x78] sm:$0xff]
                  %688 = vst [vmem:[%s656 + $0xf0] sm:$0xff] %v687
                  %v689 = vld [vmem:[%s655 + $0x80] sm:$0xff]
                  %690 = vst [vmem:[%s656 + $0x100] sm:$0xff] %v689
                  %v691 = vld [vmem:[%s655 + $0x88] sm:$0xff]
                  %692 = vst [vmem:[%s656 + $0x110] sm:$0xff] %v691
                  %v693 = vld [vmem:[%s655 + $0x90] sm:$0xff]
                  %694 = vst [vmem:[%s656 + $0x120] sm:$0xff] %v693
                  %v695 = vld [vmem:[%s655 + $0x98] sm:$0xff]
                  %696 = vst [vmem:[%s656 + $0x130] sm:$0xff] %v695
                  %v697 = vld [vmem:[%s655 + $0xa0] sm:$0xff]
                  %698 = vst [vmem:[%s656 + $0x140] sm:$0xff] %v697
                  %v699 = vld [vmem:[%s655 + $0xa8] sm:$0xff]
                  %700 = vst [vmem:[%s656 + $0x150] sm:$0xff] %v699
                  %v701 = vld [vmem:[%s655 + $0xb0] sm:$0xff]
                  %702 = vst [vmem:[%s656 + $0x160] sm:$0xff] %v701
                  %v703 = vld [vmem:[%s655 + $0xb8] sm:$0xff]
                  %704 = vst [vmem:[%s656 + $0x170] sm:$0xff] %v703
                $region72: #{tpu_custom_call.1} parent=66 // loop_footer
                  %s654 = sadd.s32 1, %s650
                $region73: #{tpu_custom_call.1} parent=66 // loop_footer_branch
                  %649 = sbr.rel target = $region69
                $region74: #{tpu_custom_call.1} parent=66 // loop_exit
                  _
              $region67: #{tpu_custom_call.1} parent=51 // pred_fallthru
                _
              // Predicated region
              $region75: #{tpu_custom_call.1} parent=51 // pred_check
                _
              $region76: #{tpu_custom_call.1} parent=51 // pred_check_branch
                %706 = sbr.rel target = $region78
              $region77: #{tpu_custom_call.1} parent=51 // pred_region
                _
              $region78: #{tpu_custom_call.1} parent=51 // pred_fallthru
                _
            $region52: #{tpu_custom_call.1} parent=47 // pred_fallthru
              _
            // Predicated region
            $region53: #{tpu_custom_call.1} parent=47 // pred_check
              _
            $region54: #{tpu_custom_call.1} parent=47 // pred_check_branch
              %589 = sbr.rel target = $region56
            $region55: #{tpu_custom_call.1} parent=47 // pred_region
              loop: start=0, step=1, limit=1
              $region57: #{tpu_custom_call.1} parent=55 // loop_pre_header
                _
              $region58: #{tpu_custom_call.1} parent=55 // loop_header
                %s592 = sphi 0, %s596
                %p593 = scmp.ge.s32.totalorder %s592, 1
                %s597 = sphi %s578, %s578
                %s598 = sphi %s583, %s583
              $region59: #{tpu_custom_call.1} parent=55 // loop_header_branch
                %595 = sbr.rel (%p593) target = $region63
              $region60: #{tpu_custom_call.1} parent=55 // loop_body
                %v599 = vld [vmem:[%s597] sm:$0xff]
                %600 = vst [vmem:[%s598] sm:$0xff] %v599
                %v601 = vld [vmem:[%s597 + $0x8] sm:$0xff]
                %602 = vst [vmem:[%s598 + $0x10] sm:$0xff] %v601
                %v603 = vld [vmem:[%s597 + $0x10] sm:$0xff]
                %604 = vst [vmem:[%s598 + $0x20] sm:$0xff] %v603
                %v605 = vld [vmem:[%s597 + $0x18] sm:$0xff]
                %606 = vst [vmem:[%s598 + $0x30] sm:$0xff] %v605
                %v607 = vld [vmem:[%s597 + $0x20] sm:$0xff]
                %608 = vst [vmem:[%s598 + $0x40] sm:$0xff] %v607
                %v609 = vld [vmem:[%s597 + $0x28] sm:$0xff]
                %610 = vst [vmem:[%s598 + $0x50] sm:$0xff] %v609
                %v611 = vld [vmem:[%s597 + $0x30] sm:$0xff]
                %612 = vst [vmem:[%s598 + $0x60] sm:$0xff] %v611
                %v613 = vld [vmem:[%s597 + $0x38] sm:$0xff]
                %614 = vst [vmem:[%s598 + $0x70] sm:$0xff] %v613
                %v615 = vld [vmem:[%s597 + $0x40] sm:$0xff]
                %616 = vst [vmem:[%s598 + $0x80] sm:$0xff] %v615
                %v617 = vld [vmem:[%s597 + $0x48] sm:$0xff]
                %618 = vst [vmem:[%s598 + $0x90] sm:$0xff] %v617
                %v619 = vld [vmem:[%s597 + $0x50] sm:$0xff]
                %620 = vst [vmem:[%s598 + $0xa0] sm:$0xff] %v619
                %v621 = vld [vmem:[%s597 + $0x58] sm:$0xff]
                %622 = vst [vmem:[%s598 + $0xb0] sm:$0xff] %v621
                %v623 = vld [vmem:[%s597 + $0x60] sm:$0xff]
                %624 = vst [vmem:[%s598 + $0xc0] sm:$0xff] %v623
                %v625 = vld [vmem:[%s597 + $0x68] sm:$0xff]
                %626 = vst [vmem:[%s598 + $0xd0] sm:$0xff] %v625
                %v627 = vld [vmem:[%s597 + $0x70] sm:$0xff]
                %628 = vst [vmem:[%s598 + $0xe0] sm:$0xff] %v627
                %v629 = vld [vmem:[%s597 + $0x78] sm:$0xff]
                %630 = vst [vmem:[%s598 + $0xf0] sm:$0xff] %v629
                %v631 = vld [vmem:[%s597 + $0x80] sm:$0xff]
                %632 = vst [vmem:[%s598 + $0x100] sm:$0xff] %v631
                %v633 = vld [vmem:[%s597 + $0x88] sm:$0xff]
                %634 = vst [vmem:[%s598 + $0x110] sm:$0xff] %v633
                %v635 = vld [vmem:[%s597 + $0x90] sm:$0xff]
                %636 = vst [vmem:[%s598 + $0x120] sm:$0xff] %v635
                %v637 = vld [vmem:[%s597 + $0x98] sm:$0xff]
                %638 = vst [vmem:[%s598 + $0x130] sm:$0xff] %v637
                %v639 = vld [vmem:[%s597 + $0xa0] sm:$0xff]
                %640 = vst [vmem:[%s598 + $0x140] sm:$0xff] %v639
                %v641 = vld [vmem:[%s597 + $0xa8] sm:$0xff]
                %642 = vst [vmem:[%s598 + $0x150] sm:$0xff] %v641
                %v643 = vld [vmem:[%s597 + $0xb0] sm:$0xff]
                %644 = vst [vmem:[%s598 + $0x160] sm:$0xff] %v643
                %v645 = vld [vmem:[%s597 + $0xb8] sm:$0xff]
                %646 = vst [vmem:[%s598 + $0x170] sm:$0xff] %v645
              $region61: #{tpu_custom_call.1} parent=55 // loop_footer
                %s596 = sadd.s32 1, %s592
              $region62: #{tpu_custom_call.1} parent=55 // loop_footer_branch
                %591 = sbr.rel target = $region58
              $region63: #{tpu_custom_call.1} parent=55 // loop_exit
                _
            $region56: #{tpu_custom_call.1} parent=47 // pred_fallthru
              _
          $region48: #{tpu_custom_call.1} parent=43 // pred_fallthru
            _
          %707 = vnop
        $region44: #{tpu_custom_call.1} parent=31 // pred_fallthru
          _
      $region32: #{tpu_custom_call.1} parent=5 // pred_fallthru
        _
      %p708 = scmp.le.s32.totalorder 2, %s13
      // Predicated region
      $region79: #{tpu_custom_call.1} parent=5 // pred_check
        %p709 = pneg %p708
      $region80: #{tpu_custom_call.1} parent=5 // pred_check_branch
        %711 = sbr.rel (%p709) target = $region82
      $region81: #{tpu_custom_call.1} parent=5 // pred_region
        %s712 = ssub.s32 %s13, 2
        // Predicated region
        $region83: #{tpu_custom_call.1} parent=81 // pred_check
          %p713 = pneg %p110
        $region84: #{tpu_custom_call.1} parent=81 // pred_check_branch
          %715 = sbr.rel (%p713) target = $region86
        $region85: #{tpu_custom_call.1} parent=81 // pred_region
          %s716 = sand.u32 %s95, 1
          %s717 = sand.u32 %s95, 1
          %s718 = smul.addr %s717, 192
          %s719 = scalar_lea.vmem [#allocation6], %s718
        $region86: #{tpu_custom_call.1} parent=81 // pred_fallthru
          _
      $region82: #{tpu_custom_call.1} parent=5 // pred_fallthru
        _
    $region6: #{tpu_custom_call.1} parent=1 // loop_footer
      %s17 = sadd.s32 1, %s13
    $region7: #{tpu_custom_call.1} parent=1 // loop_footer_branch
      %12 = sbr.rel target = $region3
    $region8: #{tpu_custom_call.1} parent=1 // loop_exit
      _
    %720 = vsyncpa [#allocation3], 1
    %s721 = scalar_lea.sflag [#allocation3], 1
    %722 = vsyncpa %s721, 1
    %723 = vsyncpa [#allocation5], 1

</llo_original>
